<compile_context>
chip_gen: v5e
topology: v5e:2x2
jax: 0.10.0
libtpu: 0.0.40
codegen_flags: <defaults>
</compile_context>

<pallas_src>
import functools
import math

import jax
import jax.numpy as jnp
from jax.experimental import pallas as pl
from jax.experimental.pallas import tpu as pltpu

_TWO_PI = 2.0 * math.pi

# Shared-argument sincos polynomial coefficients.  After the cyclic range reduction
# r -= round(r), the phase u = 2*pi*r lies in [-pi, pi]; at these degrees the
# truncation error (<3e-8 for sin, <4e-9 for cos) is below f32 roundoff, so the
# kernel matches jnp.sin/jnp.cos to ~1e-6 absolute with far fewer VALU ops.
_SIN_COEFFS = tuple((-1.0) ** k / math.factorial(2 * k + 1) for k in range(9))   # u^1..u^17
_COS_COEFFS = tuple((-1.0) ** k / math.factorial(2 * k) for k in range(10))      # u^0..u^18


def _sincos(u):
    """sin(u), cos(u) for u in [-pi, pi]; both Horner chains share w = u*u."""
    w = u * u
    sp = jnp.float32(_SIN_COEFFS[-1])
    for coef in reversed(_SIN_COEFFS[:-1]):
        sp = sp * w + jnp.float32(coef)
    cp = jnp.float32(_COS_COEFFS[-1])
    for coef in reversed(_COS_COEFFS[:-1]):
        cp = cp * w + jnp.float32(coef)
    return u * sp, cp


def _cyclic_encoder_kernel(x_ref, o_ref, *, inv_max_len, d, split_layout):
    # Compute in f32 regardless of input dtype (accuracy for bf16 inputs); cast only
    # on the final store.
    r = x_ref[...].astype(jnp.float32) * inv_max_len
    # Cyclic range reduction: one mul + floor instead of two libm reductions.
    r = r - jnp.floor(r + 0.5)              # r in [-0.5, 0.5]
    u = jnp.float32(_TWO_PI) * r            # u in [-pi, pi]
    s, c = _sincos(u)
    if split_layout:
        # (tile, 2, d_blk) output block: both halves are offset-0, full-extent,
        # lane-dense stores regardless of d.
        o_ref[:, 0, :] = s.astype(o_ref.dtype)
        o_ref[:, 1, :] = c.astype(o_ref.dtype)
    else:
        # Packed (tile, 2*d) block, used only when d % 128 == 0 so both stores are
        # lane-aligned unmasked stores (matches torch.cat layout directly).
        o_ref[:, :d] = s.astype(o_ref.dtype)
        o_ref[:, d:] = c.astype(o_ref.dtype)


def _vmem_budget_bytes():
    """Generation-aware budget for the double-buffered (in + out) block footprint."""
    try:
        cap = int(pltpu.get_tpu_info().vmem_capacity_bytes)
    except Exception:
        cap = 64 << 20                      # conservative: v7x per-TensorCore VMEM
    # ~40% of physical VMEM, never more than 24 MiB (safe on v7x's 64 MiB physical,
    # comfortably inside the 32 MiB scoped limit requested below).
    return max(4 << 20, min(cap * 2 // 5, 24 << 20))


def cyclic_encoder(x, max_len, *, tile_m=None, out_dtype=None):
    """Pallas implementation of CyclicEncoder(max_len)(x).

    x: (..., D) array. Returns (..., 2*D) with [sin | cos] along the last dim.
    out_dtype: optional narrower output dtype (e.g. jnp.bfloat16) to cut write traffic
               (the big lever on HBM-bound v5e); defaults to x.dtype (exact PyTorch
               semantics), so it stays opt-in.
    """
    out_dtype = jnp.dtype(out_dtype) if out_dtype is not None else jnp.dtype(x.dtype)
    *lead, d = x.shape
    d = int(d)
    m = 1
    for s_ in lead:
        m *= int(s_)
    xf = x.reshape(m, d)                    # contiguous reshape: free layout plumbing

    in_item = jnp.dtype(x.dtype).itemsize
    out_item = out_dtype.itemsize
    vmem_budget = _vmem_budget_bytes()

    # ---- feature tiling decision (only for embedding-scale D) -----------------------
    def _cap_rows(d_blk):
        row_bytes = 2 * (d_blk * in_item + 2 * d_blk * out_item)   # x2: double buffer
        return max(8, (vmem_budget // max(row_bytes, 1)) // 32 * 32)

    d_tile = d
    cap_rows = _cap_rows(d)
    if cap_rows < 256 and d > 512:
        # Avoid degenerate sublane-short row tiles: tile the feature dim as well.
        d_tile = 512
        cap_rows = _cap_rows(d_tile)

    # ---- row tile: multiple of 32, input block around ~1 MiB -------------------------
    if tile_m is None:
        target = max(32, ((1 << 20) // max(d_tile * in_item, 1)) // 32 * 32)
    else:
        target = max(8, int(tile_m) // 8 * 8)
    tile = max(32, min(target, cap_rows) // 32 * 32)

    # Megacore (v7x): guarantee >= 4 row-grid steps whenever the problem is big enough
    # that the ~0.35 us per-step overhead is negligible; otherwise a single grid step
    # would leave one TensorCore idle.
    if m * d_tile * in_item >= (2 << 20):
        tile = min(tile, max(32, pl.cdiv(m, 4) // 32 * 32))
    if tile >= m:
        tile = m                            # single full-extent block (always legal)

    split_layout = (d_tile != d) or (d % 128 != 0)
    kernel = functools.partial(
        _cyclic_encoder_kernel,
        inv_max_len=1.0 / float(max_len),
        d=d,
        split_layout=split_layout,
    )

    # TODO(synk): if an xprof trace ever shows exposed output writeback, sweep
    # pipeline_mode=pl.Buffered(3) on the out_specs BlockSpec (measure first).
    if d_tile == d:
        grid = (pl.cdiv(m, tile),)
        in_specs = [pl.BlockSpec((tile, d), lambda i: (i, 0))]
        if split_layout:
            out_shape = jax.ShapeDtypeStruct((m, 2, d), out_dtype)
            out_specs = pl.BlockSpec((tile, 2, d), lambda i: (i, 0, 0))
        else:
            out_shape = jax.ShapeDtypeStruct((m, 2 * d), out_dtype)
            out_specs = pl.BlockSpec((tile, 2 * d), lambda i: (i, 0))
        dims = ("parallel",)
    else:
        grid = (pl.cdiv(m, tile), pl.cdiv(d, d_tile))
        in_specs = [pl.BlockSpec((tile, d_tile), lambda i, j: (i, j))]
        out_shape = jax.ShapeDtypeStruct((m, 2, d), out_dtype)
        out_specs = pl.BlockSpec((tile, 2, d_tile), lambda i, j: (i, 0, j))
        dims = ("parallel", "parallel")

    cost = pl.CostEstimate(
        flops=30 * m * d,                   # ~22 shared-sincos VALU ops per element
        transcendentals=0,                  # no EUP sin/cos anymore
        bytes_accessed=m * d * in_item + 2 * m * d * out_item,
    )

    out = pl.pallas_call(
        kernel,
        out_shape=out_shape,
        grid_spec=pltpu.PrefetchScalarGridSpec(
            num_scalar_prefetch=0,
            grid=grid,
            in_specs=in_specs,
            out_specs=out_specs,
        ),
        compiler_params=pltpu.CompilerParams(
            dimension_semantics=dims,
            vmem_limit_bytes=32 << 20,
        ),
        cost_estimate=cost,
    )(xf)

    # (m, 2, d) and (m, 2*d) share the same row-major order, which is exactly the
    # torch.cat([sin, cos], dim=-1) layout; the reshape below is contiguous (free).
    return out.reshape(*lead, 2 * d)


def cyclic_encoder_ref(x, max_len):
    ang = 2.0 * jnp.pi * x * (1.0 / float(max_len))
    return jnp.concatenate([jnp.sin(ang), jnp.cos(ang)], axis=-1)


if __name__ == "__main__":
    MAX_LEN = 16.0

    # Small module-consistent shape; D % 128 == 0 -> packed (.., 2*D) output layout.
    B, S, D = 2, 8, 128
    x = jax.random.uniform(jax.random.PRNGKey(0), (B, S, D), dtype=jnp.float32) * MAX_LEN
    out = jax.block_until_ready(cyclic_encoder(x, MAX_LEN))
    ref = cyclic_encoder_ref(x, MAX_LEN)
    assert out.shape == (B, S, 2 * D)
    assert jnp.allclose(out, ref, atol=1e-5, rtol=1e-5)

    # Multi-tile check: >= 4 row-grid steps (pipelined, megacore-shardable on v7x).
    x2 = jax.random.uniform(jax.random.PRNGKey(1), (4, 2048, 128), dtype=jnp.float32) * MAX_LEN
    out2 = jax.block_until_ready(cyclic_encoder(x2, MAX_LEN))
    ref2 = cyclic_encoder_ref(x2, MAX_LEN)
    assert out2.shape == (4, 2048, 256)
    assert jnp.allclose(out2, ref2, atol=1e-5, rtol=1e-5)

    # Non-128-multiple feature dim (negative / out-of-period inputs): exercises the
    # lane-dense (m, 2, d) output layout and the cyclic range reduction.
    x3 = (jax.random.uniform(jax.random.PRNGKey(2), (2, 64, 96), dtype=jnp.float32) - 0.5) \
         * 2.0 * MAX_LEN
    out3 = jax.block_until_ready(cyclic_encoder(x3, MAX_LEN))
    ref3 = cyclic_encoder_ref(x3, MAX_LEN)
    assert out3.shape == (2, 64, 192)
    assert jnp.allclose(out3, ref3, atol=1e-5, rtol=1e-5)

    print("KERNEL_OK")
</pallas_src>

<mosaic_0001>
module attributes {stable_mosaic.version = 11 : i64} {
  func.func @_cyclic_encoder_kernel(%arg0: i32, %arg1: memref<16x128xf32, #tpu.memory_space<vmem>>, %arg2: memref<16x256xf32, #tpu.memory_space<vmem>>) attributes {dimension_semantics = [#tpu.dimension_semantics<parallel>], iteration_bounds = array<i64: 1>, scalar_prefetch = 0 : i64, scratch_operands = 0 : i64, tpu.core_type = #tpu.core_type<tc>, window_params = [{transform_indices = @transform_0, window_bounds = array<i64: 16, 128>}, {transform_indices = @transform_1, window_bounds = array<i64: 16, 256>}]} {
    %c0 = arith.constant 0 : index
    %c0_0 = arith.constant 0 : index
    %0 = vector.load %arg1[%c0, %c0_0] : memref<16x128xf32, #tpu.memory_space<vmem>>, vector<16x128xf32>
    %cst = arith.constant 6.250000e-02 : f32
    %1 = vector.broadcast %cst : f32 to vector<16x128xf32>
    %2 = arith.mulf %0, %1 : vector<16x128xf32>
    %cst_1 = arith.constant 5.000000e-01 : f32
    %3 = vector.broadcast %cst_1 : f32 to vector<16x128xf32>
    %4 = arith.addf %2, %3 : vector<16x128xf32>
    %5 = math.floor %4 : vector<16x128xf32>
    %6 = arith.subf %2, %5 : vector<16x128xf32>
    %cst_2 = arith.constant 6.28318548 : f32
    %7 = vector.broadcast %cst_2 : f32 to vector<16x128xf32>
    %8 = arith.mulf %7, %6 : vector<16x128xf32>
    %9 = arith.mulf %8, %8 : vector<16x128xf32>
    %cst_3 = arith.constant 2.81145736E-15 : f32
    %10 = vector.broadcast %cst_3 : f32 to vector<16x128xf32>
    %11 = arith.mulf %10, %9 : vector<16x128xf32>
    %cst_4 = arith.constant -7.6471636E-13 : f32
    %12 = vector.broadcast %cst_4 : f32 to vector<16x128xf32>
    %13 = arith.addf %11, %12 : vector<16x128xf32>
    %14 = arith.mulf %13, %9 : vector<16x128xf32>
    %cst_5 = arith.constant 1.60590444E-10 : f32
    %15 = vector.broadcast %cst_5 : f32 to vector<16x128xf32>
    %16 = arith.addf %14, %15 : vector<16x128xf32>
    %17 = arith.mulf %16, %9 : vector<16x128xf32>
    %cst_6 = arith.constant -2.50521079E-8 : f32
    %18 = vector.broadcast %cst_6 : f32 to vector<16x128xf32>
    %19 = arith.addf %17, %18 : vector<16x128xf32>
    %20 = arith.mulf %19, %9 : vector<16x128xf32>
    %cst_7 = arith.constant 2.75573188E-6 : f32
    %21 = vector.broadcast %cst_7 : f32 to vector<16x128xf32>
    %22 = arith.addf %20, %21 : vector<16x128xf32>
    %23 = arith.mulf %22, %9 : vector<16x128xf32>
    %cst_8 = arith.constant -1.98412701E-4 : f32
    %24 = vector.broadcast %cst_8 : f32 to vector<16x128xf32>
    %25 = arith.addf %23, %24 : vector<16x128xf32>
    %26 = arith.mulf %25, %9 : vector<16x128xf32>
    %cst_9 = arith.constant 0.00833333377 : f32
    %27 = vector.broadcast %cst_9 : f32 to vector<16x128xf32>
    %28 = arith.addf %26, %27 : vector<16x128xf32>
    %29 = arith.mulf %28, %9 : vector<16x128xf32>
    %cst_10 = arith.constant -0.166666672 : f32
    %30 = vector.broadcast %cst_10 : f32 to vector<16x128xf32>
    %31 = arith.addf %29, %30 : vector<16x128xf32>
    %32 = arith.mulf %31, %9 : vector<16x128xf32>
    %cst_11 = arith.constant 1.000000e+00 : f32
    %33 = vector.broadcast %cst_11 : f32 to vector<16x128xf32>
    %34 = arith.addf %32, %33 : vector<16x128xf32>
    %cst_12 = arith.constant -1.56192068E-16 : f32
    %35 = vector.broadcast %cst_12 : f32 to vector<16x128xf32>
    %36 = arith.mulf %35, %9 : vector<16x128xf32>
    %cst_13 = arith.constant 4.77947726E-14 : f32
    %37 = vector.broadcast %cst_13 : f32 to vector<16x128xf32>
    %38 = arith.addf %36, %37 : vector<16x128xf32>
    %39 = arith.mulf %38, %9 : vector<16x128xf32>
    %cst_14 = arith.constant -1.14707454E-11 : f32
    %40 = vector.broadcast %cst_14 : f32 to vector<16x128xf32>
    %41 = arith.addf %39, %40 : vector<16x128xf32>
    %42 = arith.mulf %41, %9 : vector<16x128xf32>
    %cst_15 = arith.constant 2.08767559E-9 : f32
    %43 = vector.broadcast %cst_15 : f32 to vector<16x128xf32>
    %44 = arith.addf %42, %43 : vector<16x128xf32>
    %45 = arith.mulf %44, %9 : vector<16x128xf32>
    %cst_16 = arith.constant -2.755732E-7 : f32
    %46 = vector.broadcast %cst_16 : f32 to vector<16x128xf32>
    %47 = arith.addf %45, %46 : vector<16x128xf32>
    %48 = arith.mulf %47, %9 : vector<16x128xf32>
    %cst_17 = arith.constant 2.48015876E-5 : f32
    %49 = vector.broadcast %cst_17 : f32 to vector<16x128xf32>
    %50 = arith.addf %48, %49 : vector<16x128xf32>
    %51 = arith.mulf %50, %9 : vector<16x128xf32>
    %cst_18 = arith.constant -0.00138888892 : f32
    %52 = vector.broadcast %cst_18 : f32 to vector<16x128xf32>
    %53 = arith.addf %51, %52 : vector<16x128xf32>
    %54 = arith.mulf %53, %9 : vector<16x128xf32>
    %cst_19 = arith.constant 0.0416666679 : f32
    %55 = vector.broadcast %cst_19 : f32 to vector<16x128xf32>
    %56 = arith.addf %54, %55 : vector<16x128xf32>
    %57 = arith.mulf %56, %9 : vector<16x128xf32>
    %cst_20 = arith.constant -5.000000e-01 : f32
    %58 = vector.broadcast %cst_20 : f32 to vector<16x128xf32>
    %59 = arith.addf %57, %58 : vector<16x128xf32>
    %60 = arith.mulf %59, %9 : vector<16x128xf32>
    %cst_21 = arith.constant 1.000000e+00 : f32
    %61 = vector.broadcast %cst_21 : f32 to vector<16x128xf32>
    %62 = arith.addf %60, %61 : vector<16x128xf32>
    %63 = arith.mulf %8, %34 : vector<16x128xf32>
    %c0_22 = arith.constant 0 : index
    %c0_23 = arith.constant 0 : index
    %64 = vector.load %arg2[%c0_22, %c0_23] : memref<16x256xf32, #tpu.memory_space<vmem>>, vector<16x128xf32>
    tpu.vector_store %arg2[%c0_22, %c0_23], %63 {strides = array<i32>} : memref<16x256xf32, #tpu.memory_space<vmem>>, vector<16x128xf32>,
    %c0_24 = arith.constant 0 : index
    %c128 = arith.constant 128 : index
    %65 = vector.load %arg2[%c0_24, %c128] : memref<16x256xf32, #tpu.memory_space<vmem>>, vector<16x128xf32>
    tpu.vector_store %arg2[%c0_24, %c128], %62 {strides = array<i32>} : memref<16x256xf32, #tpu.memory_space<vmem>>, vector<16x128xf32>,
    return
  }
  func.func @transform_0(%arg0: i32) -> (i32, i32) {
    %c0_i32 = arith.constant 0 : i32
    %c0_i32_0 = arith.constant 0 : i32
    return %arg0, %c0_i32 : i32, i32
  }
  func.func @transform_1(%arg0: i32) -> (i32, i32) {
    %c0_i32 = arith.constant 0 : i32
    %c0_i32_0 = arith.constant 0 : i32
    return %arg0, %c0_i32 : i32, i32
  }
}

</mosaic_0001>

<llo_original>
// kernel: tpu_custom_call.1
$region0: #{tpu_custom_call.1}
  #allocation0 [shape = 'u32[]', space=smem, size = 0x4, offset = 0x4, fixed_abs, tag = 'smem constant byte address 0x4 - core index']
  #allocation1 [shape = 'u32[72,128]{1,0:T(1,128)}', space=vmem, size = 0x9000, scoped, tag = 'internal scratch']
  %s0 = inlined_call_operand.hbm [shape: f32[16,128], index: 0, kind: input, shape index: {}]
  %s1 = inlined_call_operand.hbm [shape: f32[16,256], index: 1, kind: output, shape index: {}]
  %s2 = sld [smem:[#allocation0]]
  $region18: #{tpu_custom_call.1} parent=0
    _
  %s4 = ssub.s32 1, %s2
  %s5 = scalar_select 0, %s4, %s2
  $region1: #{tpu_custom_call.1} parent=0
    #allocation2 [shape = 'u8[8192]{0}', space=vmem, size = 0x2000, scoped, tag = 'input window, operand 0, single buffered']
    #allocation3 [shape = 's32[1]{0}', space=sflag, size = 0x4, scoped, tag = 'scoped memory for tpu_custom_call.1']
    #allocation4 [shape = 's32[1]{0}', space=sflag, size = 0x4, scoped, tag = 'scoped memory for tpu_custom_call.1']
    #allocation5 [shape = 'u8[16384]{0}', space=vmem, size = 0x4000, scoped, tag = 'output window, operand 0, single buffered']
    %6 = vsyncpa [#allocation3], 0
    %7 = vsyncpa [#allocation4], 0
    // Predicated region
    $region2: #{tpu_custom_call.1} parent=1 // pred_check
      _
    $region3: #{tpu_custom_call.1} parent=1 // pred_check_branch
      %9 = sbr.rel (0) target = $region5
    $region4: #{tpu_custom_call.1} parent=1 // pred_region
      %11 = vsyncadd [#allocation3], 0
      %s12 = sshll.u32 %s0, 4
      %s13 = int_to_ptr.hbm [resolvable:$true] %s12
      %s14 = sshll.u32 [#allocation2], 4
      %s15 = int_to_ptr.vmem [resolvable:$true] %s14
      %20 = dma.hbm_to_vmem [thread:$0]  %s13, 256, %s15, [#allocation3], 128, 128, 8
    $region5: #{tpu_custom_call.1} parent=1 // pred_fallthru
      _
    // Predicated region
    $region6: #{tpu_custom_call.1} parent=1 // pred_check
      _
    $region7: #{tpu_custom_call.1} parent=1 // pred_check_branch
      %22 = sbr.rel (0) target = $region9
    $region8: #{tpu_custom_call.1} parent=1 // pred_region
      %24 = dma.done [#allocation3], 256
    $region9: #{tpu_custom_call.1} parent=1 // pred_fallthru
      _
    %v25 = vld [vmem:[#allocation2] sm:$0xff]
    %v26 = vld [vmem:[#allocation2 + $0x8] sm:$0xff]
    %v27 = vmul.f32 %v25, 0.0625
    %v28 = vmul.f32 %v26, 0.0625
    %v29 = vadd.f32 %v27, 0.5
    %v30 = vadd.f32 %v28, 0.5
    %v31 = vfloor.f32 %v29
    %v32 = vfloor.f32 %v30
    %v33 = vsub.f32 %v27, %v31
    %v34 = vsub.f32 %v28, %v32
    %v35 = vmul.f32 %v33, 6.2831855
    %v36 = vmul.f32 %v34, 6.2831855
    %v37 = vmul.f32 %v35, %v35
    %v38 = vmul.f32 %v36, %v36
    %v39 = vmul.f32 %v37, 2.8114574e-15
    %v40 = vmul.f32 %v38, 2.8114574e-15
    %v41 = vadd.f32 %v39, -7.6471636e-13
    %v42 = vadd.f32 %v40, -7.6471636e-13
    %v43 = vmul.f32 %v41, %v37
    %v44 = vmul.f32 %v42, %v38
    %v45 = vadd.f32 %v43, 1.6059044e-10
    %v46 = vadd.f32 %v44, 1.6059044e-10
    %v47 = vmul.f32 %v45, %v37
    %v48 = vmul.f32 %v46, %v38
    %v49 = vadd.f32 %v47, -2.5052108e-08
    %v50 = vadd.f32 %v48, -2.5052108e-08
    %v51 = vmul.f32 %v49, %v37
    %v52 = vmul.f32 %v50, %v38
    %v53 = vadd.f32 %v51, 2.7557319e-06
    %v54 = vadd.f32 %v52, 2.7557319e-06
    %v55 = vmul.f32 %v53, %v37
    %v56 = vmul.f32 %v54, %v38
    %v57 = vadd.f32 %v55, -0.0001984127
    %v58 = vadd.f32 %v56, -0.0001984127
    %v59 = vmul.f32 %v57, %v37
    %v60 = vmul.f32 %v58, %v38
    %v61 = vadd.f32 %v59, 0.008333334
    %v62 = vadd.f32 %v60, 0.008333334
    %v63 = vmul.f32 %v61, %v37
    %v64 = vmul.f32 %v62, %v38
    %v65 = vadd.f32 %v63, -0.16666667
    %v66 = vadd.f32 %v64, -0.16666667
    %v67 = vmul.f32 %v65, %v37
    %v68 = vmul.f32 %v66, %v38
    %v69 = vadd.f32 %v67, 1.0
    %v70 = vadd.f32 %v68, 1.0
    %v71 = vmul.f32 %v37, -1.5619207e-16
    %v72 = vmul.f32 %v38, -1.5619207e-16
    %v73 = vadd.f32 %v71, 4.7794773e-14
    %v74 = vadd.f32 %v72, 4.7794773e-14
    %v75 = vmul.f32 %v73, %v37
    %v76 = vmul.f32 %v74, %v38
    %v77 = vadd.f32 %v75, -1.1470745e-11
    %v78 = vadd.f32 %v76, -1.1470745e-11
    %v79 = vmul.f32 %v77, %v37
    %v80 = vmul.f32 %v78, %v38
    %v81 = vadd.f32 %v79, 2.0876756e-09
    %v82 = vadd.f32 %v80, 2.0876756e-09
    %v83 = vmul.f32 %v81, %v37
    %v84 = vmul.f32 %v82, %v38
    %v85 = vadd.f32 %v83, -2.755732e-07
    %v86 = vadd.f32 %v84, -2.755732e-07
    %v87 = vmul.f32 %v85, %v37
    %v88 = vmul.f32 %v86, %v38
    %v89 = vadd.f32 %v87, 2.4801588e-05
    %v90 = vadd.f32 %v88, 2.4801588e-05
    %v91 = vmul.f32 %v89, %v37
    %v92 = vmul.f32 %v90, %v38
    %v93 = vadd.f32 %v91, -0.0013888889
    %v94 = vadd.f32 %v92, -0.0013888889
    %v95 = vmul.f32 %v93, %v37
    %v96 = vmul.f32 %v94, %v38
    %v97 = vadd.f32 %v95, 0.041666668
    %v98 = vadd.f32 %v96, 0.041666668
    %v99 = vmul.f32 %v97, %v37
    %v100 = vmul.f32 %v98, %v38
    %v101 = vadd.f32 %v99, -0.5
    %v102 = vadd.f32 %v100, -0.5
    %v103 = vmul.f32 %v101, %v37
    %v104 = vmul.f32 %v102, %v38
    %v105 = vadd.f32 %v103, 1.0
    %v106 = vadd.f32 %v104, 1.0
    %v107 = vmul.f32 %v35, %v69
    %v108 = vmul.f32 %v36, %v70
    %109 = vst [vmem:[#allocation5] sm:$0xff] %v107
    %110 = vst [vmem:[#allocation5 + $0x10] sm:$0xff] %v108
    %111 = vst [vmem:[#allocation5 + $0x8] sm:$0xff] %v105
    %112 = vst [vmem:[#allocation5 + $0x18] sm:$0xff] %v106
    // Predicated region
    $region10: #{tpu_custom_call.1} parent=1 // pred_check
      _
    $region11: #{tpu_custom_call.1} parent=1 // pred_check_branch
      %114 = sbr.rel (0) target = $region13
    $region12: #{tpu_custom_call.1} parent=1 // pred_region
      %116 = vsyncadd [#allocation4], 0
      %s117 = sshll.u32 [#allocation5], 4
      %s118 = int_to_ptr.vmem [resolvable:$true] %s117
      %s119 = sshll.u32 %s1, 4
      %s120 = int_to_ptr.hbm [resolvable:$true] %s119
      %125 = dma.vmem_to_hbm [thread:$0]  %s118, 512, %s120, [#allocation4], 256, 256, 16
    $region13: #{tpu_custom_call.1} parent=1 // pred_fallthru
      _
    // Predicated region
    $region14: #{tpu_custom_call.1} parent=1 // pred_check
      _
    $region15: #{tpu_custom_call.1} parent=1 // pred_check_branch
      %127 = sbr.rel (0) target = $region17
    $region16: #{tpu_custom_call.1} parent=1 // pred_region
      %129 = dma.done [#allocation4], 512
    $region17: #{tpu_custom_call.1} parent=1 // pred_fallthru
      _
    %130 = vsyncpa [#allocation3], 1
    %131 = vsyncpa [#allocation4], 1

</llo_original>
